<compile_context>
chip_gen: v6e
topology: v6e:2x2x1
jax: 0.10.0
libtpu: 0.0.40
codegen_flags: <defaults>
</compile_context>

<pallas_src>
import jax
import jax.numpy as jnp
import numpy as np
from jax.experimental import pallas as pl
from jax.experimental.pallas import tpu as pltpu

DEPTH = 2                      # SoftDecisionTree(depth=2) -> 3 internal nodes, 4 leaves
NB_CLASSES = 2                 # class_reward_vector has length 2 (Q.reshape(2) in get_loss)
H = W = 83                     # spatial size implied by Linear(6084, 1): 4*39*39 = 6084
C_IN = 4
C_OUT = 4
KH = KW = 7
STRIDE = 2
OH = (H - KH) // STRIDE + 1    # 39
OW = (W - KW) // STRIDE + 1    # 39
S = OH * OW                    # 1521
K = C_IN * KH * KW             # 196
KA = K + 1                     # 197 (extra ones-row folds the conv bias)
FC_IN = C_OUT * OH * OW        # 6084
N_NODES = 2 ** DEPTH - 1       # 3 internal nodes (heap/BFS indexed)
N_LEAVES = 2 ** DEPTH          # 4
NC = N_NODES * C_OUT           # 12 conv output maps across all nodes


# ----------------------------- Pallas kernel -------------------------------

def node_kernel(patches_ref, wc_ref, wf_ref, out_ref):
    """One grid step = one batch element, all tree nodes at once.

    patches_ref: (1, KA, S)  im2col patches (feature-major, lane-dense), last
                             row is all-ones so the conv bias rides the matmul
    wc_ref:      (NC, KA)    conv weights for all nodes, bias in last column
    wf_ref:      (NC, S)     fc weights re-laid-out per (node*out_channel, spatial)
    out_ref:     (1, NC, 1)  per-(node, channel) FC partial sums
    """
    patches = patches_ref[0]                                   # (KA, S)
    conv = jnp.dot(wc_ref[...], patches,
                   preferred_element_type=jnp.float32)         # (NC, S), MXU
    act = jnp.where(conv > 0, conv, 0.01 * conv)               # F.leaky_relu (slope 0.01)
    prod = act * wf_ref[...]                                   # (NC, S), VPU
    out_ref[0] = jnp.sum(prod, axis=1, keepdims=True)          # lane reduce -> (NC, 1)


# ------------------------------ glue (JAX) ---------------------------------

def extract_patches(x_nchw):
    """im2col for a 7x7 stride-2 VALID conv, emitted as (B, K, S).

    Feature order along K = (c, kh, kw); spatial order along S = (oh, ow).
    Matches PyTorch Conv2d weight flattening and reshape(B, -1) conventions.
    """
    b = x_nchw.shape[0]
    cols = []
    for kh in range(KH):
        for kw in range(KW):
            cols.append(x_nchw[:, :,
                               kh:kh + STRIDE * (OH - 1) + 1:STRIDE,
                               kw:kw + STRIDE * (OW - 1) + 1:STRIDE])  # (B,C,OH,OW)
    p = jnp.stack(cols, axis=2)             # (B, C, KH*KW, OH, OW)
    return p.reshape(b, K, S)               # contiguous: K=(c,kh,kw), S=(oh,ow)


def soft_decision_tree_forward(x_nhwc, params, class_reward):
    b = x_nhwc.shape[0]
    x = jnp.transpose(x_nhwc, (0, 3, 1, 2)).astype(jnp.float32)   # NCHW like permute(0,3,1,2)

    patches = extract_patches(x)                                  # (B, K, S)
    patches = jnp.concatenate(
        [patches, jnp.ones((b, 1, S), jnp.float32)], axis=1)      # (B, KA, S)

    # Parameter re-layout (matches PyTorch flatten conventions).
    wc = params['conv_w'].reshape(NC, K).astype(jnp.float32)       # (12, 196), rows = n*4+o
    wc = jnp.concatenate(
        [wc, params['conv_b'].reshape(NC, 1).astype(jnp.float32)], axis=1)  # (12, 197)
    wf = params['fc_w'].reshape(NC, S).astype(jnp.float32)         # (12, 1521)

    node_partials = pl.pallas_call(
        node_kernel,
        out_shape=jax.ShapeDtypeStruct((b, NC, 1), jnp.float32),
        grid_spec=pltpu.PrefetchScalarGridSpec(
            num_scalar_prefetch=0,
            grid=(b,),
            in_specs=[
                pl.BlockSpec((1, KA, S), lambda i: (i, 0, 0)),   # per-batch patch slab
                pl.BlockSpec((NC, KA), lambda i: (0, 0)),        # constant, fetched once
                pl.BlockSpec((NC, S), lambda i: (0, 0)),         # constant, fetched once
            ],
            out_specs=pl.BlockSpec((1, NC, 1), lambda i: (i, 0, 0)),
        ),
        compiler_params=pltpu.CompilerParams(
            dimension_semantics=("parallel",)),
    )(patches, wc, wf)

    # Tiny epilogue in plain JAX: 3 logits + 4 leaves per batch element.
    part = node_partials.reshape(b, N_NODES, C_OUT).sum(axis=2)        # (B, 3)
    logits = part + params['fc_b'].reshape(N_NODES)[None, :].astype(jnp.float32)
    p = jax.nn.sigmoid(logits)                                         # per-node probs

    q = jax.nn.softmax(params['leaf_dist'].astype(jnp.float32), axis=-1)   # Leaf.forward()
    r = (q * class_reward[None, :].astype(jnp.float32)).sum(axis=-1)       # (L,)

    p0, p1, p2 = p[:, 0], p[:, 1], p[:, 2]
    leaf = jnp.stack([p0 * p1,                # leaves in BFS collection order
                      p0 * (1.0 - p1),
                      (1.0 - p0) * p2,
                      (1.0 - p0) * (1.0 - p2)], axis=1)                 # (B, 4)
    return jnp.sum(leaf * r[None, :], axis=1)                           # (B,) reward_tree


# --------------------------- pure-JAX reference ----------------------------

def reference_forward(x_nhwc, params, class_reward):
    x = jnp.transpose(x_nhwc, (0, 3, 1, 2)).astype(jnp.float32)
    b = x.shape[0]
    probs = []
    for n in range(N_NODES):
        w = params['conv_w'][n]
        conv = jax.lax.conv_general_dilated(
            x, w, window_strides=(STRIDE, STRIDE), padding='VALID',
            dimension_numbers=('NCHW', 'OIHW', 'NCHW'),
            precision=jax.lax.Precision.HIGHEST)
        conv = conv + params['conv_b'][n][None, :, None, None]
        act = jnp.where(conv > 0, conv, 0.01 * conv)
        flat = act.reshape(b, -1)                         # C-major flatten (like reshape(B,-1))
        logit = jnp.dot(flat, params['fc_w'][n].reshape(FC_IN),
                        precision=jax.lax.Precision.HIGHEST) + params['fc_b'][n][0]
        probs.append(jax.nn.sigmoid(logit)[:, None])      # (B, 1)

    q = jax.nn.softmax(params['leaf_dist'], axis=-1)
    r = (q * class_reward[None, :]).sum(axis=-1)          # (L,)

    leaf_paths = []

    def rec(node, path):
        if node >= N_NODES:
            leaf_paths.append(path)
            return
        p = probs[node]
        rec(2 * node + 1, p * path)
        rec(2 * node + 2, (1.0 - p) * path)

    rec(0, jnp.ones((b, 1), jnp.float32))
    out = jnp.zeros((b,), jnp.float32)
    for leaf, path in enumerate(leaf_paths):
        out = out + jnp.sum(r[leaf] * path, axis=1)
    return out


# --------------------------------- main -------------------------------------

if __name__ == "__main__":
    key = jax.random.PRNGKey(0)
    kx, kcw, kcb, kfw, kfb, kld = jax.random.split(key, 6)

    x = jax.random.uniform(kx, (2, H, W, C_IN), jnp.float32)       # NHWC input, B=2
    params = {
        'conv_w': jax.random.normal(kcw, (N_NODES, C_OUT, C_IN, KH, KW), jnp.float32) * 0.05,
        'conv_b': jax.random.normal(kcb, (N_NODES, C_OUT), jnp.float32) * 0.05,
        'fc_w': jax.random.normal(kfw, (N_NODES, 1, FC_IN), jnp.float32) * 0.01,
        'fc_b': jax.random.normal(kfb, (N_NODES, 1), jnp.float32) * 0.01,
        'leaf_dist': jax.random.uniform(kld, (N_LEAVES, NB_CLASSES), jnp.float32),
    }
    class_reward = jnp.array([1.0, -1.0], jnp.float32)              # len == nb_classes == 2

    fwd = jax.jit(soft_decision_tree_forward)
    out = jax.block_until_ready(fwd(x, params, class_reward))
    ref = jax.block_until_ready(reference_forward(x, params, class_reward))

    assert out.shape == (2,), out.shape
    assert np.allclose(np.asarray(out), np.asarray(ref), atol=2e-3, rtol=2e-3), (out, ref)
    print("KERNEL_OK")
</pallas_src>

<mosaic_0001>
module attributes {stable_mosaic.version = 11 : i64} {
  func.func @node_kernel(%arg0: i32, %arg1: memref<1x197x1521xf32, #tpu.memory_space<vmem>>, %arg2: memref<12x197xf32, #tpu.memory_space<vmem>>, %arg3: memref<12x1521xf32, #tpu.memory_space<vmem>>, %arg4: memref<1x12x1xf32, #tpu.memory_space<vmem>>) attributes {dimension_semantics = [#tpu.dimension_semantics<parallel>], iteration_bounds = array<i64: 2>, scalar_prefetch = 0 : i64, scratch_operands = 0 : i64, tpu.core_type = #tpu.core_type<tc>, window_params = [{transform_indices = @transform_0, window_bounds = array<i64: 1, 197, 1521>}, {pipeline_mode = #tpu.pipeline_mode<synchronous>, transform_indices = @transform_1, window_bounds = array<i64: 12, 197>}, {pipeline_mode = #tpu.pipeline_mode<synchronous>, transform_indices = @transform_2, window_bounds = array<i64: 12, 1521>}, {transform_indices = @transform_3, window_bounds = array<i64: 1, 12, 1>}]} {
    %c0 = arith.constant 0 : index
    %c0_0 = arith.constant 0 : index
    %c0_1 = arith.constant 0 : index
    %0 = vector.load %arg1[%c0, %c0_0, %c0_1] : memref<1x197x1521xf32, #tpu.memory_space<vmem>>, vector<1x197x1521xf32>
    %1 = vector.shape_cast %0 : vector<1x197x1521xf32> to vector<197x1521xf32>
    %c0_2 = arith.constant 0 : index
    %c0_3 = arith.constant 0 : index
    %2 = vector.load %arg2[%c0_2, %c0_3] : memref<12x197xf32, #tpu.memory_space<vmem>>, vector<12x197xf32>
    %cst = arith.constant dense<0.000000e+00> : vector<12x1521xf32>
    %3 = tpu.matmul %2, %1, %cst {dimension_numbers = #tpu.dot_dimension_numbers<[1], [0], [0], [1], [0, 0, 1, 1], [], []>} : vector<12x197xf32>, vector<197x1521xf32>, vector<12x1521xf32> -> vector<12x1521xf32>
    %cst_4 = arith.constant 0.000000e+00 : f32
    %4 = vector.broadcast %cst_4 : f32 to vector<12x1521xf32>
    %5 = arith.cmpf ogt, %3, %4 : vector<12x1521xf32>
    %cst_5 = arith.constant 0.00999999977 : f32
    %6 = vector.broadcast %cst_5 : f32 to vector<12x1521xf32>
    %7 = arith.mulf %6, %3 : vector<12x1521xf32>
    %8 = arith.select %5, %3, %7 : vector<12x1521xi1>, vector<12x1521xf32>
    %c0_6 = arith.constant 0 : index
    %c0_7 = arith.constant 0 : index
    %9 = vector.load %arg3[%c0_6, %c0_7] : memref<12x1521xf32, #tpu.memory_space<vmem>>, vector<12x1521xf32>
    %10 = arith.mulf %8, %9 : vector<12x1521xf32>
    %cst_8 = arith.constant dense<0.000000e+00> : vector<12xf32>
    %11 = vector.multi_reduction <add>, %10, %cst_8 [1] : vector<12x1521xf32> to vector<12xf32>
    %12 = vector.shape_cast %11 : vector<12xf32> to vector<12x1xf32>
    %c0_9 = arith.constant 0 : index
    %c0_10 = arith.constant 0 : index
    %c0_11 = arith.constant 0 : index
    %13 = vector.load %arg4[%c0_9, %c0_10, %c0_11] : memref<1x12x1xf32, #tpu.memory_space<vmem>>, vector<1x12x1xf32>
    %14 = vector.shape_cast %13 : vector<1x12x1xf32> to vector<12x1xf32>
    %15 = vector.shape_cast %12 : vector<12x1xf32> to vector<1x12x1xf32>
    tpu.vector_store %arg4[%c0_9, %c0_10, %c0_11], %15 {strides = array<i32>} : memref<1x12x1xf32, #tpu.memory_space<vmem>>, vector<1x12x1xf32>,
    return
  }
  func.func @transform_0(%arg0: i32) -> (i32, i32, i32) {
    %c0_i32 = arith.constant 0 : i32
    %c0_i32_0 = arith.constant 0 : i32
    %c0_i32_1 = arith.constant 0 : i32
    return %arg0, %c0_i32, %c0_i32_0 : i32, i32, i32
  }
  func.func @transform_1(%arg0: i32) -> (i32, i32) {
    %c0_i32 = arith.constant 0 : i32
    %c0_i32_0 = arith.constant 0 : i32
    %c0_i32_1 = arith.constant 0 : i32
    return %c0_i32, %c0_i32_0 : i32, i32
  }
  func.func @transform_2(%arg0: i32) -> (i32, i32) {
    %c0_i32 = arith.constant 0 : i32
    %c0_i32_0 = arith.constant 0 : i32
    %c0_i32_1 = arith.constant 0 : i32
    return %c0_i32, %c0_i32_0 : i32, i32
  }
  func.func @transform_3(%arg0: i32) -> (i32, i32, i32) {
    %c0_i32 = arith.constant 0 : i32
    %c0_i32_0 = arith.constant 0 : i32
    %c0_i32_1 = arith.constant 0 : i32
    return %arg0, %c0_i32, %c0_i32_0 : i32, i32, i32
  }
}

</mosaic_0001>

<llo_original>
// kernel: soft_decision_tree_forward.1
$region0: #{soft_decision_tree_forward.1}
  #allocation0 [shape = 'u32[]', space=smem, size = 0x4, offset = 0x4, fixed_abs, tag = 'smem constant byte address 0x4 - core index']
  #allocation1 [shape = 'u32[144,128]{1,0:T(1,128)}', space=vmem, size = 0x12000, scoped, tag = 'internal scratch']
  %s0 = inlined_call_operand.vmem [shape: f32[2,197,1521], index: 0, kind: input, shape index: {}]
  %s1 = inlined_call_operand.vmem [shape: f32[12,197], index: 1, kind: input, shape index: {}]
  %s2 = inlined_call_operand.vmem [shape: f32[12,1521], index: 2, kind: input, shape index: {}]
  %s3 = inlined_call_operand.vmem [shape: f32[2,12,1], index: 3, kind: output, shape index: {}]
  %s4 = sld [smem:[#allocation0]]
  $region45: #{soft_decision_tree_forward.1} parent=0
    _
  %s6 = ssub.s32 1, %s4
  %s7 = scalar_select 0, %s6, %s4
  loop: start=0, step=1, limit=4
  $region2: #{soft_decision_tree_forward.1} parent=0 // loop_pre_header
    _
  $region3: #{soft_decision_tree_forward.1} parent=0 // loop_header
    %s9 = sphi 0, %s13
    %p10 = scmp.ge.s32.totalorder %s9, 4
    %s19 = sphi 0, %s21
    %s22 = sphi 0, %s19
    %s23 = sphi 0, %s22
    %s39 = sphi 0, %s23
    %s43 = sphi 0, %s43
    %s45 = sphi 0, %s43
    %s46 = sphi 0, %s45
    %s60 = sphi 0, %s46
    %s64 = sphi 0, %s64
    %s66 = sphi 0, %s64
    %s67 = sphi 0, %s66
    %s81 = sphi 0, %s67
    %s87 = sphi 0, %s89
    %s90 = sphi 0, %s87
    %s91 = sphi 0, %s90
    %s107 = sphi 0, %s91
  $region4: #{soft_decision_tree_forward.1} parent=0 // loop_header_branch
    %12 = sbr.rel (%p10) target = $region8
  $region5: #{soft_decision_tree_forward.1} parent=0 // loop_body
    %s14 = ssub.s32 %s9, 1
    %s15 = ssub.s32 %s9, 2
    %s16 = sadd.s32 %s9, 1
    %s17 = ssub.s32 %s9, %s16
    %p18 = scmp.eq.s32.totalorder %s17, 0
    %s20 = sadd.s32 %s19, 1
    %s21 = scalar_select %p18, %s19, %s20
    %p24 = pneg %p18
    %p25 = scmp.eq.s32.totalorder %s9, 1
    %p26 = por %p24, %p25
    %p27 = scmp.ne.s32.totalorder %s19, %s22
    %p28 = scmp.eq.s32.totalorder %s9, 0
    %p29 = por %p27, %p28
    %p30 = scmp.ne.s32.totalorder %s19, %s22
    %p31 = scmp.eq.s32.totalorder %s14, 1
    %p32 = por %p30, %p31
    %p33 = scmp.ne.s32.totalorder %s22, %s23
    %p34 = scmp.eq.s32.totalorder %s14, 0
    %p35 = por %p33, %p34
    %p36 = scmp.ne.s32.totalorder %s22, %s23
    %p37 = scmp.eq.s32.totalorder %s15, 1
    %p38 = por %p36, %p37
    %p40 = scmp.ne.s32.totalorder %s23, %s39
    %p41 = scmp.eq.s32.totalorder %s15, 0
    %p42 = por %p40, %p41
    %s44 = sadd.s32 %s43, 1
    %p47 = scmp.eq.s32.totalorder %s9, 1
    %p48 = scmp.ne.s32.totalorder %s43, %s45
    %p49 = scmp.eq.s32.totalorder %s9, 0
    %p50 = por %p48, %p49
    %p51 = scmp.ne.s32.totalorder %s43, %s45
    %p52 = scmp.eq.s32.totalorder %s14, 1
    %p53 = por %p51, %p52
    %p54 = scmp.ne.s32.totalorder %s45, %s46
    %p55 = scmp.eq.s32.totalorder %s14, 0
    %p56 = por %p54, %p55
    %p57 = scmp.ne.s32.totalorder %s45, %s46
    %p58 = scmp.eq.s32.totalorder %s15, 1
    %p59 = por %p57, %p58
    %p61 = scmp.ne.s32.totalorder %s46, %s60
    %p62 = scmp.eq.s32.totalorder %s15, 0
    %p63 = por %p61, %p62
    %s65 = sadd.s32 %s64, 1
    %p68 = scmp.eq.s32.totalorder %s9, 1
    %p69 = scmp.ne.s32.totalorder %s64, %s66
    %p70 = scmp.eq.s32.totalorder %s9, 0
    %p71 = por %p69, %p70
    %p72 = scmp.ne.s32.totalorder %s64, %s66
    %p73 = scmp.eq.s32.totalorder %s14, 1
    %p74 = por %p72, %p73
    %p75 = scmp.ne.s32.totalorder %s66, %s67
    %p76 = scmp.eq.s32.totalorder %s14, 0
    %p77 = por %p75, %p76
    %p78 = scmp.ne.s32.totalorder %s66, %s67
    %p79 = scmp.eq.s32.totalorder %s15, 1
    %p80 = por %p78, %p79
    %p82 = scmp.ne.s32.totalorder %s67, %s81
    %p83 = scmp.eq.s32.totalorder %s15, 0
    %p84 = por %p82, %p83
    %s85 = ssub.s32 %s9, %s16
    %p86 = scmp.eq.s32.totalorder %s85, 0
    %s88 = sadd.s32 %s87, 1
    %s89 = scalar_select %p86, %s87, %s88
    %p92 = pneg %p86
    %p93 = scmp.eq.s32.totalorder %s9, 1
    %p94 = por %p92, %p93
    %p95 = scmp.ne.s32.totalorder %s87, %s90
    %p96 = scmp.eq.s32.totalorder %s9, 0
    %p97 = por %p95, %p96
    %p98 = scmp.ne.s32.totalorder %s87, %s90
    %p99 = scmp.eq.s32.totalorder %s14, 1
    %p100 = por %p98, %p99
    %p101 = scmp.ne.s32.totalorder %s90, %s91
    %p102 = scmp.eq.s32.totalorder %s14, 0
    %p103 = por %p101, %p102
    %p104 = scmp.ne.s32.totalorder %s90, %s91
    %p105 = scmp.eq.s32.totalorder %s15, 1
    %p106 = por %p104, %p105
    %p108 = scmp.ne.s32.totalorder %s91, %s107
    %p109 = scmp.eq.s32.totalorder %s15, 0
    %p110 = por %p108, %p109
    %p111 = scmp.le.s32.totalorder 1, %s9
    %p112 = scmp.lt.s32.totalorder %s9, 3
    %p113 = pnand %p111, %p112
    %p114 = pneg %p113
    // Predicated region
    $region9: #{soft_decision_tree_forward.1} parent=5 // pred_check
      _
    $region10: #{soft_decision_tree_forward.1} parent=5 // pred_check_branch
      %116 = sbr.rel (%p113) target = $region12
    $region11: #{soft_decision_tree_forward.1} parent=5 // pred_region
      %s117 = ssub.s32 %s9, 1
      // Predicated region
      $region13: #{soft_decision_tree_forward.1} parent=11 // pred_check
        %p118 = pneg %p56
      $region14: #{soft_decision_tree_forward.1} parent=11 // pred_check_branch
        %120 = sbr.rel (%p118) target = $region16
      $region15: #{soft_decision_tree_forward.1} parent=11 // pred_region
        _
      $region16: #{soft_decision_tree_forward.1} parent=11 // pred_fallthru
        _
      // Predicated region
      $region17: #{soft_decision_tree_forward.1} parent=11 // pred_check
        %p121 = pneg %p77
      $region18: #{soft_decision_tree_forward.1} parent=11 // pred_check_branch
        %123 = sbr.rel (%p121) target = $region20
      $region19: #{soft_decision_tree_forward.1} parent=11 // pred_region
        _
      $region20: #{soft_decision_tree_forward.1} parent=11 // pred_fallthru
        _
    $region12: #{soft_decision_tree_forward.1} parent=5 // pred_fallthru
      _
    %p124 = scmp.lt.s32.totalorder %s9, 2
    // Predicated region
    $region21: #{soft_decision_tree_forward.1} parent=5 // pred_check
      %p125 = pneg %p124
    $region22: #{soft_decision_tree_forward.1} parent=5 // pred_check_branch
      %127 = sbr.rel (%p125) target = $region24
    $region23: #{soft_decision_tree_forward.1} parent=5 // pred_region
      // Predicated region
      $region25: #{soft_decision_tree_forward.1} parent=23 // pred_check
        %p128 = pneg %p29
      $region26: #{soft_decision_tree_forward.1} parent=23 // pred_check_branch
        %130 = sbr.rel (%p128) target = $region28
      $region27: #{soft_decision_tree_forward.1} parent=23 // pred_region
        %p131 = scmp.lt.s32.totalorder %s9, 1
        %s132 = scalar_select %p131, %s9, 1
        %s133 = smul.addr %s132, 300
        %s134 = smul.addr %s133, 8
        %s135 = scalar_lea.vmem %s0, %s134
      $region28: #{soft_decision_tree_forward.1} parent=23 // pred_fallthru
        _
    $region24: #{soft_decision_tree_forward.1} parent=5 // pred_fallthru
      _
    %p136 = scmp.le.s32.totalorder 1, %s9
    %p137 = scmp.lt.s32.totalorder %s9, 3
    %p138 = pnand %p136, %p137
    %p139 = pneg %p138
    // Predicated region
    $region29: #{soft_decision_tree_forward.1} parent=5 // pred_check
      _
    $region30: #{soft_decision_tree_forward.1} parent=5 // pred_check_branch
      %141 = sbr.rel (%p138) target = $region32
    $region31: #{soft_decision_tree_forward.1} parent=5 // pred_region
      %s142 = ssub.s32 %s9, 1
      %p143 = scmp.lt.s32.totalorder %s14, 1
      %s144 = scalar_select %p143, %s14, 1
      %s145 = smul.addr %s144, 300
      %s146 = smul.addr %s145, 8
      %s147 = scalar_lea.vmem %s0, %s146
      %p148 = pneg %p35
      %p149 = pneg %p32
      %p150 = pneg %p56
      %p151 = pneg %p53
      %p152 = pneg %p77
      %p153 = pneg %p74
      %p154 = pneg %p103
      %p155 = pneg %p100
      %p156 = scmp.lt.s32.totalorder %s14, 1
      %s157 = scalar_select %p156, %s14, 1
      %s158 = smul.addr %s157, 2
      %s159 = smul.addr %s158, 8
      %s160 = scalar_lea.vmem %s3, %s159
      %p161 = scmp.lt.s32.totalorder %s14, 1
      %s162 = scalar_select %p161, %s14, 1
      %s163 = smul.addr %s162, 300
      %s164 = smul.addr %s163, 8
      %s165 = scalar_lea.vmem %s0, %s164
      %p166 = scmp.lt.s32.totalorder %s14, 1
      %s167 = scalar_select %p166, %s14, 1
      %s168 = smul.addr %s167, 2
      %s169 = smul.addr %s168, 8
      %s170 = scalar_lea.vmem %s3, %s169
      %v171 = vld [vmem:[%s165] sm:$0xff]
      %v172 = vld [vmem:[%s165 + $0x8] sm:$0xff]
      %v173 = vld [vmem:[%s165 + $0x10] sm:$0xff]
      %v174 = vld [vmem:[%s165 + $0x18] sm:$0xff]
      %v175 = vld [vmem:[%s165 + $0x20] sm:$0xff]
      %v176 = vld [vmem:[%s165 + $0x28] sm:$0xff]
      %v177 = vld [vmem:[%s165 + $0x30] sm:$0xff]
      %v178 = vld [vmem:[%s165 + $0x38] sm:$0xff]
      %v179 = vld [vmem:[%s165 + $0x40] sm:$0xff]
      %v180 = vld [vmem:[%s165 + $0x48] sm:$0xff]
      %v181 = vld [vmem:[%s165 + $0x50] sm:$0xff]
      %v182 = vld [vmem:[%s165 + $0x58] sm:$0xff]
      %v183 = vld [vmem:[%s165 + $0x60] sm:$0xff]
      %v184 = vld [vmem:[%s165 + $0x68] sm:$0xff]
      %v185 = vld [vmem:[%s165 + $0x70] sm:$0xff]
      %v186 = vld [vmem:[%s165 + $0x78] sm:$0xff]
      %v187 = vld [vmem:[%s165 + $0x80] sm:$0xff]
      %v188 = vld [vmem:[%s165 + $0x88] sm:$0xff]
      %v189 = vld [vmem:[%s165 + $0x90] sm:$0xff]
      %v190 = vld [vmem:[%s165 + $0x98] sm:$0xff]
      %v191 = vld [vmem:[%s165 + $0xa0] sm:$0xff]
      %v192 = vld [vmem:[%s165 + $0xa8] sm:$0xff]
      %v193 = vld [vmem:[%s165 + $0xb0] sm:$0xff]
      %v194 = vld [vmem:[%s165 + $0xb8] sm:$0xff]
      %v195 = vld [vmem:[%s165 + $0xc0] sm:$0xff]
      %v196 = vld [vmem:[%s165 + $0xc8] sm:$0xff]
      %v197 = vld [vmem:[%s165 + $0xd0] sm:$0xff]
      %v198 = vld [vmem:[%s165 + $0xd8] sm:$0xff]
      %v199 = vld [vmem:[%s165 + $0xe0] sm:$0xff]
      %v200 = vld [vmem:[%s165 + $0xe8] sm:$0xff]
      %v201 = vld [vmem:[%s165 + $0xf0] sm:$0xff]
      %v202 = vld [vmem:[%s165 + $0xf8] sm:$0xff]
      %v203 = vld [vmem:[%s165 + $0x100] sm:$0xff]
      %v204 = vld [vmem:[%s165 + $0x108] sm:$0xff]
      %v205 = vld [vmem:[%s165 + $0x110] sm:$0xff]
      %v206 = vld [vmem:[%s165 + $0x118] sm:$0xff]
      %v207 = vld [vmem:[%s165 + $0x120] sm:$0xff]
      %v208 = vld [vmem:[%s165 + $0x128] sm:$0xff]
      %v209 = vld [vmem:[%s165 + $0x130] sm:$0xff]
      %v210 = vld [vmem:[%s165 + $0x138] sm:$0xff]
      %v211 = vld [vmem:[%s165 + $0x140] sm:$0xff]
      %v212 = vld [vmem:[%s165 + $0x148] sm:$0xff]
      %v213 = vld [vmem:[%s165 + $0x150] sm:$0xff]
      %v214 = vld [vmem:[%s165 + $0x158] sm:$0xff]
      %v215 = vld [vmem:[%s165 + $0x160] sm:$0xff]
      %v216 = vld [vmem:[%s165 + $0x168] sm:$0xff]
      %v217 = vld [vmem:[%s165 + $0x170] sm:$0xff]
      %v218 = vld [vmem:[%s165 + $0x178] sm:$0xff]
      %v219 = vld [vmem:[%s165 + $0x180] sm:$0xff]
      %v220 = vld [vmem:[%s165 + $0x188] sm:$0xff]
      %v221 = vld [vmem:[%s165 + $0x190] sm:$0xff]
      %v222 = vld [vmem:[%s165 + $0x198] sm:$0xff]
      %v223 = vld [vmem:[%s165 + $0x1a0] sm:$0xff]
      %v224 = vld [vmem:[%s165 + $0x1a8] sm:$0xff]
      %v225 = vld [vmem:[%s165 + $0x1b0] sm:$0xff]
      %v226 = vld [vmem:[%s165 + $0x1b8] sm:$0xff]
      %v227 = vld [vmem:[%s165 + $0x1c0] sm:$0xff]
      %v228 = vld [vmem:[%s165 + $0x1c8] sm:$0xff]
      %v229 = vld [vmem:[%s165 + $0x1d0] sm:$0xff]
      %v230 = vld [vmem:[%s165 + $0x1d8] sm:$0xff]
      %v231 = vld [vmem:[%s165 + $0x1e0] sm:$0xff]
      %v232 = vld [vmem:[%s165 + $0x1e8] sm:$0xff]
      %v233 = vld [vmem:[%s165 + $0x1f0] sm:$0xff]
      %v234 = vld [vmem:[%s165 + $0x1f8] sm:$0xff]
      %v235 = vld [vmem:[%s165 + $0x200] sm:$0xff]
      %v236 = vld [vmem:[%s165 + $0x208] sm:$0xff]
      %v237 = vld [vmem:[%s165 + $0x210] sm:$0xff]
      %v238 = vld [vmem:[%s165 + $0x218] sm:$0xff]
      %v239 = vld [vmem:[%s165 + $0x220] sm:$0xff]
      %v240 = vld [vmem:[%s165 + $0x228] sm:$0xff]
      %v241 = vld [vmem:[%s165 + $0x230] sm:$0xff]
      %v242 = vld [vmem:[%s165 + $0x238] sm:$0xff]
      %v243 = vld [vmem:[%s165 + $0x240] sm:$0xff]
      %v244 = vld [vmem:[%s165 + $0x248] sm:$0xff]
      %v245 = vld [vmem:[%s165 + $0x250] sm:$0xff]
      %v246 = vld [vmem:[%s165 + $0x258] sm:$0xff]
      %v247 = vld [vmem:[%s165 + $0x260] sm:$0xff]
      %v248 = vld [vmem:[%s165 + $0x268] sm:$0xff]
      %v249 = vld [vmem:[%s165 + $0x270] sm:$0xff]
      %v250 = vld [vmem:[%s165 + $0x278] sm:$0xff]
      %v251 = vld [vmem:[%s165 + $0x280] sm:$0xff]
      %v252 = vld [vmem:[%s165 + $0x288] sm:$0xff]
      %v253 = vld [vmem:[%s165 + $0x290] sm:$0xff]
      %v254 = vld [vmem:[%s165 + $0x298] sm:$0xff]
      %v255 = vld [vmem:[%s165 + $0x2a0] sm:$0xff]
      %v256 = vld [vmem:[%s165 + $0x2a8] sm:$0xff]
      %v257 = vld [vmem:[%s165 + $0x2b0] sm:$0xff]
      %v258 = vld [vmem:[%s165 + $0x2b8] sm:$0xff]
      %v259 = vld [vmem:[%s165 + $0x2c0] sm:$0xff]
      %v260 = vld [vmem:[%s165 + $0x2c8] sm:$0xff]
      %v261 = vld [vmem:[%s165 + $0x2d0] sm:$0xff]
      %v262 = vld [vmem:[%s165 + $0x2d8] sm:$0xff]
      %v263 = vld [vmem:[%s165 + $0x2e0] sm:$0xff]
      %v264 = vld [vmem:[%s165 + $0x2e8] sm:$0xff]
      %v265 = vld [vmem:[%s165 + $0x2f0] sm:$0xff]
      %v266 = vld [vmem:[%s165 + $0x2f8] sm:$0xff]
      %v267 = vld [vmem:[%s165 + $0x300] sm:$0xff]
      %v268 = vld [vmem:[%s165 + $0x308] sm:$0xff]
      %v269 = vld [vmem:[%s165 + $0x310] sm:$0xff]
      %v270 = vld [vmem:[%s165 + $0x318] sm:$0xff]
      %v271 = vld [vmem:[%s165 + $0x320] sm:$0xff]
      %v272 = vld [vmem:[%s165 + $0x328] sm:$0xff]
      %v273 = vld [vmem:[%s165 + $0x330] sm:$0xff]
      %v274 = vld [vmem:[%s165 + $0x338] sm:$0xff]
      %v275 = vld [vmem:[%s165 + $0x340] sm:$0xff]
      %v276 = vld [vmem:[%s165 + $0x348] sm:$0xff]
      %v277 = vld [vmem:[%s165 + $0x350] sm:$0xff]
      %v278 = vld [vmem:[%s165 + $0x358] sm:$0xff]
      %v279 = vld [vmem:[%s165 + $0x360] sm:$0xff]
      %v280 = vld [vmem:[%s165 + $0x368] sm:$0xff]
      %v281 = vld [vmem:[%s165 + $0x370] sm:$0xff]
      %v282 = vld [vmem:[%s165 + $0x378] sm:$0xff]
      %v283 = vld [vmem:[%s165 + $0x380] sm:$0xff]
      %v284 = vld [vmem:[%s165 + $0x388] sm:$0xff]
      %v285 = vld [vmem:[%s165 + $0x390] sm:$0xff]
      %v286 = vld [vmem:[%s165 + $0x398] sm:$0xff]
      %v287 = vld [vmem:[%s165 + $0x3a0] sm:$0xff]
      %v288 = vld [vmem:[%s165 + $0x3a8] sm:$0xff]
      %v289 = vld [vmem:[%s165 + $0x3b0] sm:$0xff]
      %v290 = vld [vmem:[%s165 + $0x3b8] sm:$0xff]
      %v291 = vld [vmem:[%s165 + $0x3c0] sm:$0xff]
      %v292 = vld [vmem:[%s165 + $0x3c8] sm:$0xff]
      %v293 = vld [vmem:[%s165 + $0x3d0] sm:$0xff]
      %v294 = vld [vmem:[%s165 + $0x3d8] sm:$0xff]
      %v295 = vld [vmem:[%s165 + $0x3e0] sm:$0xff]
      %v296 = vld [vmem:[%s165 + $0x3e8] sm:$0xff]
      %v297 = vld [vmem:[%s165 + $0x3f0] sm:$0xff]
      %v298 = vld [vmem:[%s165 + $0x3f8] sm:$0xff]
      %v299 = vld [vmem:[%s165 + $0x400] sm:$0xff]
      %v300 = vld [vmem:[%s165 + $0x408] sm:$0xff]
      %v301 = vld [vmem:[%s165 + $0x410] sm:$0xff]
      %v302 = vld [vmem:[%s165 + $0x418] sm:$0xff]
      %v303 = vld [vmem:[%s165 + $0x420] sm:$0xff]
      %v304 = vld [vmem:[%s165 + $0x428] sm:$0xff]
      %v305 = vld [vmem:[%s165 + $0x430] sm:$0xff]
      %v306 = vld [vmem:[%s165 + $0x438] sm:$0xff]
      %v307 = vld [vmem:[%s165 + $0x440] sm:$0xff]
      %v308 = vld [vmem:[%s165 + $0x448] sm:$0xff]
      %v309 = vld [vmem:[%s165 + $0x450] sm:$0xff]
      %v310 = vld [vmem:[%s165 + $0x458] sm:$0xff]
      %v311 = vld [vmem:[%s165 + $0x460] sm:$0xff]
      %v312 = vld [vmem:[%s165 + $0x468] sm:$0xff]
      %v313 = vld [vmem:[%s165 + $0x470] sm:$0xff]
      %v314 = vld [vmem:[%s165 + $0x478] sm:$0xff]
      %v315 = vld [vmem:[%s165 + $0x480] sm:$0xff]
      %v316 = vld [vmem:[%s165 + $0x488] sm:$0xff]
      %v317 = vld [vmem:[%s165 + $0x490] sm:$0xff]
      %v318 = vld [vmem:[%s165 + $0x498] sm:$0xff]
      %v319 = vld [vmem:[%s165 + $0x4a0] sm:$0xff]
      %v320 = vld [vmem:[%s165 + $0x4a8] sm:$0xff]
      %v321 = vld [vmem:[%s165 + $0x4b0] sm:$0xff]
      %v322 = vld [vmem:[%s165 + $0x4b8] sm:$0xff]
      %v323 = vld [vmem:[%s165 + $0x4c0] sm:$0xff]
      %v324 = vld [vmem:[%s165 + $0x4c8] sm:$0xff]
      %v325 = vld [vmem:[%s165 + $0x4d0] sm:$0xff]
      %v326 = vld [vmem:[%s165 + $0x4d8] sm:$0xff]
      %v327 = vld [vmem:[%s165 + $0x4e0] sm:$0xff]
      %v328 = vld [vmem:[%s165 + $0x4e8] sm:$0xff]
      %v329 = vld [vmem:[%s165 + $0x4f0] sm:$0xff]
      %v330 = vld [vmem:[%s165 + $0x4f8] sm:$0xff]
      %v331 = vld [vmem:[%s165 + $0x500] sm:$0xff]
      %v332 = vld [vmem:[%s165 + $0x508] sm:$0xff]
      %v333 = vld [vmem:[%s165 + $0x510] sm:$0xff]
      %v334 = vld [vmem:[%s165 + $0x518] sm:$0xff]
      %v335 = vld [vmem:[%s165 + $0x520] sm:$0xff]
      %v336 = vld [vmem:[%s165 + $0x528] sm:$0xff]
      %v337 = vld [vmem:[%s165 + $0x530] sm:$0xff]
      %v338 = vld [vmem:[%s165 + $0x538] sm:$0xff]
      %v339 = vld [vmem:[%s165 + $0x540] sm:$0xff]
      %v340 = vld [vmem:[%s165 + $0x548] sm:$0xff]
      %v341 = vld [vmem:[%s165 + $0x550] sm:$0xff]
      %v342 = vld [vmem:[%s165 + $0x558] sm:$0xff]
      %v343 = vld [vmem:[%s165 + $0x560] sm:$0xff]
      %v344 = vld [vmem:[%s165 + $0x568] sm:$0xff]
      %v345 = vld [vmem:[%s165 + $0x570] sm:$0xff]
      %v346 = vld [vmem:[%s165 + $0x578] sm:$0xff]
      %v347 = vld [vmem:[%s165 + $0x580] sm:$0xff]
      %v348 = vld [vmem:[%s165 + $0x588] sm:$0xff]
      %v349 = vld [vmem:[%s165 + $0x590] sm:$0xff]
      %v350 = vld [vmem:[%s165 + $0x598] sm:$0xff]
      %v351 = vld [vmem:[%s165 + $0x5a0] sm:$0xff]
      %v352 = vld [vmem:[%s165 + $0x5a8] sm:$0xff]
      %v353 = vld [vmem:[%s165 + $0x5b0] sm:$0xff]
      %v354 = vld [vmem:[%s165 + $0x5b8] sm:$0xff]
      %v355 = vld [vmem:[%s165 + $0x5c0] sm:$0xff]
      %v356 = vld [vmem:[%s165 + $0x5c8] sm:$0xff]
      %v357 = vld [vmem:[%s165 + $0x5d0] sm:$0xff]
      %v358 = vld [vmem:[%s165 + $0x5d8] sm:$0xff]
      %v359 = vld [vmem:[%s165 + $0x5e0] sm:$0xff]
      %v360 = vld [vmem:[%s165 + $0x5e8] sm:$0xff]
      %v361 = vld [vmem:[%s165 + $0x5f0] sm:$0xff]
      %v362 = vld [vmem:[%s165 + $0x5f8] sm:$0xff]
      %v363 = vld [vmem:[%s165 + $0x600] sm:$0xff]
      %v364 = vld [vmem:[%s165 + $0x608] sm:$0xff]
      %v365 = vld [vmem:[%s165 + $0x610] sm:$0xff]
      %v366 = vld [vmem:[%s165 + $0x618] sm:$0xff]
      %v367 = vld [vmem:[%s165 + $0x620] sm:$0xff]
      %v368 = vld [vmem:[%s165 + $0x628] sm:$0xff]
      %v369 = vld [vmem:[%s165 + $0x630] sm:$0xff]
      %v370 = vld [vmem:[%s165 + $0x638] sm:$0xff]
      %v371 = vld [vmem:[%s165 + $0x640] sm:$0xff]
      %v372 = vld [vmem:[%s165 + $0x648] sm:$0xff]
      %v373 = vld [vmem:[%s165 + $0x650] sm:$0xff]
      %v374 = vld [vmem:[%s165 + $0x658] sm:$0xff]
      %v375 = vld [vmem:[%s165 + $0x660] sm:$0xff]
      %v376 = vld [vmem:[%s165 + $0x668] sm:$0xff]
      %v377 = vld [vmem:[%s165 + $0x670] sm:$0xff]
      %v378 = vld [vmem:[%s165 + $0x678] sm:$0xff]
      %v379 = vld [vmem:[%s165 + $0x680] sm:$0xff]
      %v380 = vld [vmem:[%s165 + $0x688] sm:$0xff]
      %v381 = vld [vmem:[%s165 + $0x690] sm:$0xff]
      %v382 = vld [vmem:[%s165 + $0x698] sm:$0xff]
      %v383 = vld [vmem:[%s165 + $0x6a0] sm:$0xff]
      %v384 = vld [vmem:[%s165 + $0x6a8] sm:$0xff]
      %v385 = vld [vmem:[%s165 + $0x6b0] sm:$0xff]
      %v386 = vld [vmem:[%s165 + $0x6b8] sm:$0xff]
      %v387 = vld [vmem:[%s165 + $0x6c0] sm:$0xff]
      %v388 = vld [vmem:[%s165 + $0x6c8] sm:$0xff]
      %v389 = vld [vmem:[%s165 + $0x6d0] sm:$0xff]
      %v390 = vld [vmem:[%s165 + $0x6d8] sm:$0xff]
      %v391 = vld [vmem:[%s165 + $0x6e0] sm:$0xff]
      %v392 = vld [vmem:[%s165 + $0x6e8] sm:$0xff]
      %v393 = vld [vmem:[%s165 + $0x6f0] sm:$0xff]
      %v394 = vld [vmem:[%s165 + $0x6f8] sm:$0xff]
      %v395 = vld [vmem:[%s165 + $0x700] sm:$0xff]
      %v396 = vld [vmem:[%s165 + $0x708] sm:$0xff]
      %v397 = vld [vmem:[%s165 + $0x710] sm:$0xff]
      %v398 = vld [vmem:[%s165 + $0x718] sm:$0xff]
      %v399 = vld [vmem:[%s165 + $0x720] sm:$0xff]
      %v400 = vld [vmem:[%s165 + $0x728] sm:$0xff]
      %v401 = vld [vmem:[%s165 + $0x730] sm:$0xff]
      %v402 = vld [vmem:[%s165 + $0x738] sm:$0xff]
      %v403 = vld [vmem:[%s165 + $0x740] sm:$0xff]
      %v404 = vld [vmem:[%s165 + $0x748] sm:$0xff]
      %v405 = vld [vmem:[%s165 + $0x750] sm:$0xff]
      %v406 = vld [vmem:[%s165 + $0x758] sm:$0xff]
      %v407 = vld [vmem:[%s165 + $0x760] sm:$0xff]
      %v408 = vld [vmem:[%s165 + $0x768] sm:$0xff]
      %v409 = vld [vmem:[%s165 + $0x770] sm:$0xff]
      %v410 = vld [vmem:[%s165 + $0x778] sm:$0xff]
      %v411 = vld [vmem:[%s165 + $0x780] sm:$0xff]
      %v412 = vld [vmem:[%s165 + $0x788] sm:$0xff]
      %v413 = vld [vmem:[%s165 + $0x790] sm:$0xff]
      %v414 = vld [vmem:[%s165 + $0x798] sm:$0xff]
      %v415 = vld [vmem:[%s165 + $0x7a0] sm:$0xff]
      %v416 = vld [vmem:[%s165 + $0x7a8] sm:$0xff]
      %v417 = vld [vmem:[%s165 + $0x7b0] sm:$0xff]
      %v418 = vld [vmem:[%s165 + $0x7b8] sm:$0xff]
      %v419 = vld [vmem:[%s165 + $0x7c0] sm:$0xff]
      %v420 = vld [vmem:[%s165 + $0x7c8] sm:$0xff]
      %v421 = vld [vmem:[%s165 + $0x7d0] sm:$0xff]
      %v422 = vld [vmem:[%s165 + $0x7d8] sm:$0xff]
      %v423 = vld [vmem:[%s165 + $0x7e0] sm:$0xff]
      %v424 = vld [vmem:[%s165 + $0x7e8] sm:$0xff]
      %v425 = vld [vmem:[%s165 + $0x7f0] sm:$0xff]
      %v426 = vld [vmem:[%s165 + $0x7f8] sm:$0xff]
      %v427 = vld [vmem:[%s165 + $0x800] sm:$0xff]
      %v428 = vld [vmem:[%s165 + $0x808] sm:$0xff]
      %v429 = vld [vmem:[%s165 + $0x810] sm:$0xff]
      %v430 = vld [vmem:[%s165 + $0x818] sm:$0xff]
      %v431 = vld [vmem:[%s165 + $0x820] sm:$0xff]
      %v432 = vld [vmem:[%s165 + $0x828] sm:$0xff]
      %v433 = vld [vmem:[%s165 + $0x830] sm:$0xff]
      %v434 = vld [vmem:[%s165 + $0x838] sm:$0xff]
      %v435 = vld [vmem:[%s165 + $0x840] sm:$0xff]
      %v436 = vld [vmem:[%s165 + $0x848] sm:$0xff]
      %v437 = vld [vmem:[%s165 + $0x850] sm:$0xff]
      %v438 = vld [vmem:[%s165 + $0x858] sm:$0xff]
      %v439 = vld [vmem:[%s165 + $0x860] sm:$0xff]
      %v440 = vld [vmem:[%s165 + $0x868] sm:$0xff]
      %v441 = vld [vmem:[%s165 + $0x870] sm:$0xff]
      %v442 = vld [vmem:[%s165 + $0x878] sm:$0xff]
      %v443 = vld [vmem:[%s165 + $0x880] sm:$0xff]
      %v444 = vld [vmem:[%s165 + $0x888] sm:$0xff]
      %v445 = vld [vmem:[%s165 + $0x890] sm:$0xff]
      %v446 = vld [vmem:[%s165 + $0x898] sm:$0xff]
      %v447 = vld [vmem:[%s165 + $0x8a0] sm:$0xff]
      %v448 = vld [vmem:[%s165 + $0x8a8] sm:$0xff]
      %v449 = vld [vmem:[%s165 + $0x8b0] sm:$0xff]
      %v450 = vld [vmem:[%s165 + $0x8b8] sm:$0xff]
      %v451 = vld [vmem:[%s165 + $0x8c0] sm:$0xff]
      %v452 = vld [vmem:[%s165 + $0x8c8] sm:$0xff]
      %v453 = vld [vmem:[%s165 + $0x8d0] sm:$0xff]
      %v454 = vld [vmem:[%s165 + $0x8d8] sm:$0xff]
      %v455 = vld [vmem:[%s165 + $0x8e0] sm:$0xff]
      %v456 = vld [vmem:[%s165 + $0x8e8] sm:$0xff]
      %v457 = vld [vmem:[%s165 + $0x8f0] sm:$0xff]
      %v458 = vld [vmem:[%s165 + $0x8f8] sm:$0xff]
      %v459 = vld [vmem:[%s165 + $0x900] sm:$0x1f]
      %v460 = vld [vmem:[%s165 + $0x908] sm:$0x1f]
      %v461 = vld [vmem:[%s165 + $0x910] sm:$0x1f]
      %v462 = vld [vmem:[%s165 + $0x918] sm:$0x1f]
      %v463 = vld [vmem:[%s165 + $0x920] sm:$0x1f]
      %v464 = vld [vmem:[%s165 + $0x928] sm:$0x1f]
      %v465 = vld [vmem:[%s165 + $0x930] sm:$0x1f]
      %v466 = vld [vmem:[%s165 + $0x938] sm:$0x1f]
      %v467 = vld [vmem:[%s165 + $0x940] sm:$0x1f]
      %v468 = vld [vmem:[%s165 + $0x948] sm:$0x1f]
      %v469 = vld [vmem:[%s165 + $0x950] sm:$0x1f]
      %v470 = vld [vmem:[%s165 + $0x958] sm:$0x1f]
      %v471 = vld [vmem:[%s1] sm:$0xff]
      %v472 = vld [vmem:[%s1 + $0x8] sm:$0xff]
      %v473 = vld [vmem:[%s1 + $0x10] sm:$0xf]
      %v474 = vld [vmem:[%s1 + $0x18] sm:$0xf]
      %vm475 = vcmask 564224
      %v477 = vsel %vm475, %v472, 0
      %v480 = vsel %vm475, %v474, 0
      %vm482 = vcmask 1044480
      %v484 = vsel %vm482, %v459, 0
      %v487 = vsel %vm482, %v460, 0
      %v490 = vsel %vm482, %v461, 0
      %v493 = vsel %vm482, %v462, 0
      %v496 = vsel %vm482, %v463, 0
      %v499 = vsel %vm482, %v464, 0
      %v502 = vsel %vm482, %v465, 0
      %v505 = vsel %vm482, %v466, 0
      %v508 = vsel %vm482, %v467, 0
      %v511 = vsel %vm482, %v468, 0
      %v514 = vsel %vm482, %v469, 0
      %v517 = vsel %vm482, %v470, 0
      %519 = vmatprep.subr.mxu0 %v352
      %520 = vmatpush1.msra.mxu0 %v351
      %521 = vmatprep.subr.mxu0 %v340
      %522 = vmatpush1.msra.mxu0 %v339
      %523 = vmatprep.subr.mxu0 %v328
      %524 = vmatpush1.msra.mxu0 %v327
      %525 = vmatprep.subr.mxu0 %v316
      %526 = vmatpush1.msra.mxu0 %v315
      %527 = vmatprep.subr.mxu0 %v304
      %528 = vmatpush1.msra.mxu0 %v303
      %529 = vmatprep.subr.mxu0 %v292
      %530 = vmatpush1.msra.mxu0 %v291
      %531 = vmatprep.subr.mxu0 %v280
      %532 = vmatpush1.msra.mxu0 %v279
      %533 = vmatprep.subr.mxu0 %v268
      %534 = vmatpush1.msra.mxu0 %v267
      %535 = vmatprep.subr.mxu0 %v256
      %536 = vmatpush1.msra.mxu0 %v255
      %537 = vmatprep.subr.mxu0 %v244
      %538 = vmatpush1.msra.mxu0 %v243
      %539 = vmatprep.subr.mxu0 %v232
      %540 = vmatpush1.msra.mxu0 %v231
      %541 = vmatprep.subr.mxu0 %v220
      %542 = vmatpush1.msra.mxu0 %v219
      %543 = vmatprep.subr.mxu0 %v208
      %544 = vmatpush1.msra.mxu0 %v207
      %545 = vmatprep.subr.mxu0 %v196
      %546 = vmatpush1.msra.mxu0 %v195
      %547 = vmatprep.subr.mxu0 %v184
      %548 = vmatpush1.msra.mxu0 %v183
      %549 = vmatprep.subr.mxu0 %v172
      %550 = vmatpush1.msra.mxu0 %v171
      %551 = vmatprep.subr.mxu0 0.0
      %552 = vmatpush2.msra.mxu0 0.0
      %553 = vmatprep.subr.mxu0 0.0
      %554 = vmatpush2.msra.mxu0 0.0
      %555 = vmatprep.subr.mxu0 0.0
      %556 = vmatpush2.msra.mxu0 0.0
      %557 = vmatprep.subr.mxu0 0.0
      %558 = vmatpush2.msra.mxu0 0.0
      %559 = vmatprep.subr.mxu0 0.0
      %560 = vmatpush2.msra.mxu0 0.0
      %561 = vmatprep.subr.mxu0 0.0
      %562 = vmatpush2.msra.mxu0 0.0
      %563 = vmatprep.subr.mxu0 0.0
      %564 = vmatpush2.msra.mxu0 0.0
      %565 = vmatprep.subr.mxu0 %v487
      %566 = vmatpush2.msra.mxu0 %v484
      %567 = vmatprep.subr.mxu0 %v448
      %568 = vmatpush2.msra.mxu0 %v447
      %569 = vmatprep.subr.mxu0 %v436
      %570 = vmatpush2.msra.mxu0 %v435
      %571 = vmatprep.subr.mxu0 %v424
      %572 = vmatpush2.msra.mxu0 %v423
      %573 = vmatprep.subr.mxu0 %v412
      %574 = vmatpush2.msra.mxu0 %v411
      %575 = vmatprep.subr.mxu0 %v400
      %576 = vmatpush2.msra.mxu0 %v399
      %577 = vmatprep.subr.mxu0 %v388
      %578 = vmatpush2.msra.mxu0 %v387
      %579 = vmatprep.subr.mxu0 %v376
      %580 = vmatpush2.msra.mxu0 %v375
      %581 = vmatprep.subr.mxu0 %v364
      %582 = vmatpush2.msra.mxu0 %v363
      %583 = vmatprep.mubr.f32.mxu0 %v477
      %584 = vmatmul.mubr.f32.gmra.mxu0 %v471
      %v585 = vpop.f32.mrf.mxu0
      %v586 = vadd.f32 0.0, %v585
      %v587 = vpop.f32.mrf.mxu0
      %v588 = vadd.f32 0.0, %v587
      %589 = vmatprep.mubr.f32.mxu0 %v480
      %590 = vmatmul.mubr.f32.gmra.mxu0 %v473
      %v591 = vpop.f32.mrf.mxu0
      %v592 = vadd.f32 0.0, %v591
      %v593 = vpop.f32.mrf.mxu0
      %v594 = vadd.f32 0.0, %v593
      %595 = vdwg.mxu0
      %596 = vmatprep.subr.mxu0 %v354
      %597 = vmatpush1.msra.mxu0 %v353
      %598 = vmatprep.subr.mxu0 %v342
      %599 = vmatpush1.msra.mxu0 %v341
      %600 = vmatprep.subr.mxu0 %v330
      %601 = vmatpush1.msra.mxu0 %v329
      %602 = vmatprep.subr.mxu0 %v318
      %603 = vmatpush1.msra.mxu0 %v317
      %604 = vmatprep.subr.mxu0 %v306
      %605 = vmatpush1.msra.mxu0 %v305
      %606 = vmatprep.subr.mxu0 %v294
      %607 = vmatpush1.msra.mxu0 %v293
      %608 = vmatprep.subr.mxu0 %v282
      %609 = vmatpush1.msra.mxu0 %v281
      %610 = vmatprep.subr.mxu0 %v270
      %611 = vmatpush1.msra.mxu0 %v269
      %612 = vmatprep.subr.mxu0 %v258
      %613 = vmatpush1.msra.mxu0 %v257
      %614 = vmatprep.subr.mxu0 %v246
      %615 = vmatpush1.msra.mxu0 %v245
      %616 = vmatprep.subr.mxu0 %v234
      %617 = vmatpush1.msra.mxu0 %v233
      %618 = vmatprep.subr.mxu0 %v222
      %619 = vmatpush1.msra.mxu0 %v221
      %620 = vmatprep.subr.mxu0 %v210
      %621 = vmatpush1.msra.mxu0 %v209
      %622 = vmatprep.subr.mxu0 %v198
      %623 = vmatpush1.msra.mxu0 %v197
      %624 = vmatprep.subr.mxu0 %v186
      %625 = vmatpush1.msra.mxu0 %v185
      %626 = vmatprep.subr.mxu0 %v174
      %627 = vmatpush1.msra.mxu0 %v173
      %628 = vmatprep.subr.mxu0 0.0
      %629 = vmatpush2.msra.mxu0 0.0
      %630 = vmatprep.subr.mxu0 0.0
      %631 = vmatpush2.msra.mxu0 0.0
      %632 = vmatprep.subr.mxu0 0.0
      %633 = vmatpush2.msra.mxu0 0.0
      %634 = vmatprep.subr.mxu0 0.0
      %635 = vmatpush2.msra.mxu0 0.0
      %636 = vmatprep.subr.mxu0 0.0
      %637 = vmatpush2.msra.mxu0 0.0
      %638 = vmatprep.subr.mxu0 0.0
      %639 = vmatpush2.msra.mxu0 0.0
      %640 = vmatprep.subr.mxu0 0.0
      %641 = vmatpush2.msra.mxu0 0.0
      %642 = vmatprep.subr.mxu0 %v493
      %643 = vmatpush2.msra.mxu0 %v490
      %644 = vmatprep.subr.mxu0 %v450
      %645 = vmatpush2.msra.mxu0 %v449
      %646 = vmatprep.subr.mxu0 %v438
      %647 = vmatpush2.msra.mxu0 %v437
      %648 = vmatprep.subr.mxu0 %v426
      %649 = vmatpush2.msra.mxu0 %v425
      %650 = vmatprep.subr.mxu0 %v414
      %651 = vmatpush2.msra.mxu0 %v413
      %652 = vmatprep.subr.mxu0 %v402
      %653 = vmatpush2.msra.mxu0 %v401
      %654 = vmatprep.subr.mxu0 %v390
      %655 = vmatpush2.msra.mxu0 %v389
      %656 = vmatprep.subr.mxu0 %v378
      %657 = vmatpush2.msra.mxu0 %v377
      %658 = vmatprep.subr.mxu0 %v366
      %659 = vmatpush2.msra.mxu0 %v365
      %660 = vmatprep.mubr.f32.mxu0 %v477
      %661 = vmatmul.mubr.f32.gmra.mxu0 %v471
      %v662 = vpop.f32.mrf.mxu0
      %v663 = vadd.f32 0.0, %v662
      %v664 = vpop.f32.mrf.mxu0
      %v665 = vadd.f32 0.0, %v664
      %666 = vmatprep.mubr.f32.mxu0 %v480
      %667 = vmatmul.mubr.f32.gmra.mxu0 %v473
      %v668 = vpop.f32.mrf.mxu0
      %v669 = vadd.f32 0.0, %v668
      %v670 = vpop.f32.mrf.mxu0
      %v671 = vadd.f32 0.0, %v670
      %672 = vdwg.mxu0
      %673 = vmatprep.subr.mxu0 %v356
      %674 = vmatpush1.msra.mxu0 %v355
      %675 = vmatprep.subr.mxu0 %v344
      %676 = vmatpush1.msra.mxu0 %v343
      %677 = vmatprep.subr.mxu0 %v332
      %678 = vmatpush1.msra.mxu0 %v331
      %679 = vmatprep.subr.mxu0 %v320
      %680 = vmatpush1.msra.mxu0 %v319
      %681 = vmatprep.subr.mxu0 %v308
      %682 = vmatpush1.msra.mxu0 %v307
      %683 = vmatprep.subr.mxu0 %v296
      %684 = vmatpush1.msra.mxu0 %v295
      %685 = vmatprep.subr.mxu0 %v284
      %686 = vmatpush1.msra.mxu0 %v283
      %687 = vmatprep.subr.mxu0 %v272
      %688 = vmatpush1.msra.mxu0 %v271
      %689 = vmatprep.subr.mxu0 %v260
      %690 = vmatpush1.msra.mxu0 %v259
      %691 = vmatprep.subr.mxu0 %v248
      %692 = vmatpush1.msra.mxu0 %v247
      %693 = vmatprep.subr.mxu0 %v236
      %694 = vmatpush1.msra.mxu0 %v235
      %695 = vmatprep.subr.mxu0 %v224
      %696 = vmatpush1.msra.mxu0 %v223
      %697 = vmatprep.subr.mxu0 %v212
      %698 = vmatpush1.msra.mxu0 %v211
      %699 = vmatprep.subr.mxu0 %v200
      %700 = vmatpush1.msra.mxu0 %v199
      %701 = vmatprep.subr.mxu0 %v188
      %702 = vmatpush1.msra.mxu0 %v187
      %703 = vmatprep.subr.mxu0 %v176
      %704 = vmatpush1.msra.mxu0 %v175
      %705 = vmatprep.subr.mxu0 0.0
      %706 = vmatpush2.msra.mxu0 0.0
      %707 = vmatprep.subr.mxu0 0.0
      %708 = vmatpush2.msra.mxu0 0.0
      %709 = vmatprep.subr.mxu0 0.0
      %710 = vmatpush2.msra.mxu0 0.0
      %711 = vmatprep.subr.mxu0 0.0
      %712 = vmatpush2.msra.mxu0 0.0
      %713 = vmatprep.subr.mxu0 0.0
      %714 = vmatpush2.msra.mxu0 0.0
      %715 = vmatprep.subr.mxu0 0.0
      %716 = vmatpush2.msra.mxu0 0.0
      %717 = vmatprep.subr.mxu0 0.0
      %718 = vmatpush2.msra.mxu0 0.0
      %719 = vmatprep.subr.mxu0 %v499
      %720 = vmatpush2.msra.mxu0 %v496
      %721 = vmatprep.subr.mxu0 %v452
      %722 = vmatpush2.msra.mxu0 %v451
      %723 = vmatprep.subr.mxu0 %v440
      %724 = vmatpush2.msra.mxu0 %v439
      %725 = vmatprep.subr.mxu0 %v428
      %726 = vmatpush2.msra.mxu0 %v427
      %727 = vmatprep.subr.mxu0 %v416
      %728 = vmatpush2.msra.mxu0 %v415
      %729 = vmatprep.subr.mxu0 %v404
      %730 = vmatpush2.msra.mxu0 %v403
      %731 = vmatprep.subr.mxu0 %v392
      %732 = vmatpush2.msra.mxu0 %v391
      %733 = vmatprep.subr.mxu0 %v380
      %734 = vmatpush2.msra.mxu0 %v379
      %735 = vmatprep.subr.mxu0 %v368
      %736 = vmatpush2.msra.mxu0 %v367
      %737 = vmatprep.mubr.f32.mxu0 %v477
      %738 = vmatmul.mubr.f32.gmra.mxu0 %v471
      %v739 = vpop.f32.mrf.mxu0
      %v740 = vadd.f32 0.0, %v739
      %v741 = vpop.f32.mrf.mxu0
      %v742 = vadd.f32 0.0, %v741
      %743 = vmatprep.mubr.f32.mxu0 %v480
      %744 = vmatmul.mubr.f32.gmra.mxu0 %v473
      %v745 = vpop.f32.mrf.mxu0
      %v746 = vadd.f32 0.0, %v745
      %v747 = vpop.f32.mrf.mxu0
      %v748 = vadd.f32 0.0, %v747
      %749 = vdwg.mxu0
      %750 = vmatprep.subr.mxu0 %v358
      %751 = vmatpush1.msra.mxu0 %v357
      %752 = vmatprep.subr.mxu0 %v346
      %753 = vmatpush1.msra.mxu0 %v345
      %754 = vmatprep.subr.mxu0 %v334
      %755 = vmatpush1.msra.mxu0 %v333
      %756 = vmatprep.subr.mxu0 %v322
      %757 = vmatpush1.msra.mxu0 %v321
      %758 = vmatprep.subr.mxu0 %v310
      %759 = vmatpush1.msra.mxu0 %v309
      %760 = vmatprep.subr.mxu0 %v298
      %761 = vmatpush1.msra.mxu0 %v297
      %762 = vmatprep.subr.mxu0 %v286
      %763 = vmatpush1.msra.mxu0 %v285
      %764 = vmatprep.subr.mxu0 %v274
      %765 = vmatpush1.msra.mxu0 %v273
      %766 = vmatprep.subr.mxu0 %v262
      %767 = vmatpush1.msra.mxu0 %v261
      %768 = vmatprep.subr.mxu0 %v250
      %769 = vmatpush1.msra.mxu0 %v249
      %770 = vmatprep.subr.mxu0 %v238
      %771 = vmatpush1.msra.mxu0 %v237
      %772 = vmatprep.subr.mxu0 %v226
      %773 = vmatpush1.msra.mxu0 %v225
      %774 = vmatprep.subr.mxu0 %v214
      %775 = vmatpush1.msra.mxu0 %v213
      %776 = vmatprep.subr.mxu0 %v202
      %777 = vmatpush1.msra.mxu0 %v201
      %778 = vmatprep.subr.mxu0 %v190
      %779 = vmatpush1.msra.mxu0 %v189
      %780 = vmatprep.subr.mxu0 %v178
      %781 = vmatpush1.msra.mxu0 %v177
      %782 = vmatprep.subr.mxu0 0.0
      %783 = vmatpush2.msra.mxu0 0.0
      %784 = vmatprep.subr.mxu0 0.0
      %785 = vmatpush2.msra.mxu0 0.0
      %786 = vmatprep.subr.mxu0 0.0
      %787 = vmatpush2.msra.mxu0 0.0
      %788 = vmatprep.subr.mxu0 0.0
      %789 = vmatpush2.msra.mxu0 0.0
      %790 = vmatprep.subr.mxu0 0.0
      %791 = vmatpush2.msra.mxu0 0.0
      %792 = vmatprep.subr.mxu0 0.0
      %793 = vmatpush2.msra.mxu0 0.0
      %794 = vmatprep.subr.mxu0 0.0
      %795 = vmatpush2.msra.mxu0 0.0
      %796 = vmatprep.subr.mxu0 %v505
      %797 = vmatpush2.msra.mxu0 %v502
      %798 = vmatprep.subr.mxu0 %v454
      %799 = vmatpush2.msra.mxu0 %v453
      %800 = vmatprep.subr.mxu0 %v442
      %801 = vmatpush2.msra.mxu0 %v441
      %802 = vmatprep.subr.mxu0 %v430
      %803 = vmatpush2.msra.mxu0 %v429
      %804 = vmatprep.subr.mxu0 %v418
      %805 = vmatpush2.msra.mxu0 %v417
      %806 = vmatprep.subr.mxu0 %v406
      %807 = vmatpush2.msra.mxu0 %v405
      %808 = vmatprep.subr.mxu0 %v394
      %809 = vmatpush2.msra.mxu0 %v393
      %810 = vmatprep.subr.mxu0 %v382
      %811 = vmatpush2.msra.mxu0 %v381
      %812 = vmatprep.subr.mxu0 %v370
      %813 = vmatpush2.msra.mxu0 %v369
      %814 = vmatprep.mubr.f32.mxu0 %v477
      %815 = vmatmul.mubr.f32.gmra.mxu0 %v471
      %v816 = vpop.f32.mrf.mxu0
      %v817 = vadd.f32 0.0, %v816
      %v818 = vpop.f32.mrf.mxu0
      %v819 = vadd.f32 0.0, %v818
      %820 = vmatprep.mubr.f32.mxu0 %v480
      %821 = vmatmul.mubr.f32.gmra.mxu0 %v473
      %v822 = vpop.f32.mrf.mxu0
      %v823 = vadd.f32 0.0, %v822
      %v824 = vpop.f32.mrf.mxu0
      %v825 = vadd.f32 0.0, %v824
      %826 = vdwg.mxu0
      %827 = vmatprep.subr.mxu0 %v360
      %828 = vmatpush1.msra.mxu0 %v359
      %829 = vmatprep.subr.mxu0 %v348
      %830 = vmatpush1.msra.mxu0 %v347
      %831 = vmatprep.subr.mxu0 %v336
      %832 = vmatpush1.msra.mxu0 %v335
      %833 = vmatprep.subr.mxu0 %v324
      %834 = vmatpush1.msra.mxu0 %v323
      %835 = vmatprep.subr.mxu0 %v312
      %836 = vmatpush1.msra.mxu0 %v311
      %837 = vmatprep.subr.mxu0 %v300
      %838 = vmatpush1.msra.mxu0 %v299
      %839 = vmatprep.subr.mxu0 %v288
      %840 = vmatpush1.msra.mxu0 %v287
      %841 = vmatprep.subr.mxu0 %v276
      %842 = vmatpush1.msra.mxu0 %v275
      %843 = vmatprep.subr.mxu0 %v264
      %844 = vmatpush1.msra.mxu0 %v263
      %845 = vmatprep.subr.mxu0 %v252
      %846 = vmatpush1.msra.mxu0 %v251
      %847 = vmatprep.subr.mxu0 %v240
      %848 = vmatpush1.msra.mxu0 %v239
      %849 = vmatprep.subr.mxu0 %v228
      %850 = vmatpush1.msra.mxu0 %v227
      %851 = vmatprep.subr.mxu0 %v216
      %852 = vmatpush1.msra.mxu0 %v215
      %853 = vmatprep.subr.mxu0 %v204
      %854 = vmatpush1.msra.mxu0 %v203
      %855 = vmatprep.subr.mxu0 %v192
      %856 = vmatpush1.msra.mxu0 %v191
      %857 = vmatprep.subr.mxu0 %v180
      %858 = vmatpush1.msra.mxu0 %v179
      %859 = vmatprep.subr.mxu0 0.0
      %860 = vmatpush2.msra.mxu0 0.0
      %861 = vmatprep.subr.mxu0 0.0
      %862 = vmatpush2.msra.mxu0 0.0
      %863 = vmatprep.subr.mxu0 0.0
      %864 = vmatpush2.msra.mxu0 0.0
      %865 = vmatprep.subr.mxu0 0.0
      %866 = vmatpush2.msra.mxu0 0.0
      %867 = vmatprep.subr.mxu0 0.0
      %868 = vmatpush2.msra.mxu0 0.0
      %869 = vmatprep.subr.mxu0 0.0
      %870 = vmatpush2.msra.mxu0 0.0
      %871 = vmatprep.subr.mxu0 0.0
      %872 = vmatpush2.msra.mxu0 0.0
      %873 = vmatprep.subr.mxu0 %v511
      %874 = vmatpush2.msra.mxu0 %v508
      %875 = vmatprep.subr.mxu0 %v456
      %876 = vmatpush2.msra.mxu0 %v455
      %877 = vmatprep.subr.mxu0 %v444
      %878 = vmatpush2.msra.mxu0 %v443
      %879 = vmatprep.subr.mxu0 %v432
      %880 = vmatpush2.msra.mxu0 %v431
      %881 = vmatprep.subr.mxu0 %v420
      %882 = vmatpush2.msra.mxu0 %v419
      %883 = vmatprep.subr.mxu0 %v408
      %884 = vmatpush2.msra.mxu0 %v407
      %885 = vmatprep.subr.mxu0 %v396
      %886 = vmatpush2.msra.mxu0 %v395
      %887 = vmatprep.subr.mxu0 %v384
      %888 = vmatpush2.msra.mxu0 %v383
      %889 = vmatprep.subr.mxu0 %v372
      %890 = vmatpush2.msra.mxu0 %v371
      %891 = vmatprep.mubr.f32.mxu0 %v477
      %892 = vmatmul.mubr.f32.gmra.mxu0 %v471
      %v893 = vpop.f32.mrf.mxu0
      %v894 = vadd.f32 0.0, %v893
      %v895 = vpop.f32.mrf.mxu0
      %v896 = vadd.f32 0.0, %v895
      %897 = vmatprep.mubr.f32.mxu0 %v480
      %898 = vmatmul.mubr.f32.gmra.mxu0 %v473
      %v899 = vpop.f32.mrf.mxu0
      %v900 = vadd.f32 0.0, %v899
      %v901 = vpop.f32.mrf.mxu0
      %v902 = vadd.f32 0.0, %v901
      %903 = vdwg.mxu0
      %904 = vmatprep.subr.mxu0 %v362
      %905 = vmatpush1.msra.mxu0 %v361
      %906 = vmatprep.subr.mxu0 %v350
      %907 = vmatpush1.msra.mxu0 %v349
      %908 = vmatprep.subr.mxu0 %v338
      %909 = vmatpush1.msra.mxu0 %v337
      %910 = vmatprep.subr.mxu0 %v326
      %911 = vmatpush1.msra.mxu0 %v325
      %912 = vmatprep.subr.mxu0 %v314
      %913 = vmatpush1.msra.mxu0 %v313
      %914 = vmatprep.subr.mxu0 %v302
      %915 = vmatpush1.msra.mxu0 %v301
      %916 = vmatprep.subr.mxu0 %v290
      %917 = vmatpush1.msra.mxu0 %v289
      %918 = vmatprep.subr.mxu0 %v278
      %919 = vmatpush1.msra.mxu0 %v277
      %920 = vmatprep.subr.mxu0 %v266
      %921 = vmatpush1.msra.mxu0 %v265
      %922 = vmatprep.subr.mxu0 %v254
      %923 = vmatpush1.msra.mxu0 %v253
      %924 = vmatprep.subr.mxu0 %v242
      %925 = vmatpush1.msra.mxu0 %v241
      %926 = vmatprep.subr.mxu0 %v230
      %927 = vmatpush1.msra.mxu0 %v229
      %928 = vmatprep.subr.mxu0 %v218
      %929 = vmatpush1.msra.mxu0 %v217
      %930 = vmatprep.subr.mxu0 %v206
      %931 = vmatpush1.msra.mxu0 %v205
      %932 = vmatprep.subr.mxu0 %v194
      %933 = vmatpush1.msra.mxu0 %v193
      %934 = vmatprep.subr.mxu0 %v182
      %935 = vmatpush1.msra.mxu0 %v181
      %936 = vmatprep.subr.mxu0 0.0
      %937 = vmatpush2.msra.mxu0 0.0
      %938 = vmatprep.subr.mxu0 0.0
      %939 = vmatpush2.msra.mxu0 0.0
      %940 = vmatprep.subr.mxu0 0.0
      %941 = vmatpush2.msra.mxu0 0.0
      %942 = vmatprep.subr.mxu0 0.0
      %943 = vmatpush2.msra.mxu0 0.0
      %944 = vmatprep.subr.mxu0 0.0
      %945 = vmatpush2.msra.mxu0 0.0
      %946 = vmatprep.subr.mxu0 0.0
      %947 = vmatpush2.msra.mxu0 0.0
      %948 = vmatprep.subr.mxu0 0.0
      %949 = vmatpush2.msra.mxu0 0.0
      %950 = vmatprep.subr.mxu0 %v517
      %951 = vmatpush2.msra.mxu0 %v514
      %952 = vmatprep.subr.mxu0 %v458
      %953 = vmatpush2.msra.mxu0 %v457
      %954 = vmatprep.subr.mxu0 %v446
      %955 = vmatpush2.msra.mxu0 %v445
      %956 = vmatprep.subr.mxu0 %v434
      %957 = vmatpush2.msra.mxu0 %v433
      %958 = vmatprep.subr.mxu0 %v422
      %959 = vmatpush2.msra.mxu0 %v421
      %960 = vmatprep.subr.mxu0 %v410
      %961 = vmatpush2.msra.mxu0 %v409
      %962 = vmatprep.subr.mxu0 %v398
      %963 = vmatpush2.msra.mxu0 %v397
      %964 = vmatprep.subr.mxu0 %v386
      %965 = vmatpush2.msra.mxu0 %v385
      %966 = vmatprep.subr.mxu0 %v374
      %967 = vmatpush2.msra.mxu0 %v373
      %968 = vmatprep.mubr.f32.mxu0 %v477
      %969 = vmatmul.mubr.f32.gmra.mxu0 %v471
      %v970 = vpop.f32.mrf.mxu0
      %v971 = vadd.f32 0.0, %v970
      %v972 = vpop.f32.mrf.mxu0
      %v973 = vadd.f32 0.0, %v972
      %974 = vmatprep.mubr.f32.mxu0 %v480
      %975 = vmatmul.mubr.f32.gmra.mxu0 %v473
      %v976 = vpop.f32.mrf.mxu0
      %v977 = vadd.f32 0.0, %v976
      %v978 = vpop.f32.mrf.mxu0
      %v979 = vadd.f32 0.0, %v978
      %980 = vdwg.mxu0
      %vm981 = vcmp.gt.f32.partialorder %v586, 0.0
      %vm982 = vcmp.gt.f32.partialorder %v588, 0.0
      %vm983 = vcmp.gt.f32.partialorder %v663, 0.0
      %vm984 = vcmp.gt.f32.partialorder %v665, 0.0
      %vm985 = vcmp.gt.f32.partialorder %v740, 0.0
      %vm986 = vcmp.gt.f32.partialorder %v742, 0.0
      %vm987 = vcmp.gt.f32.partialorder %v817, 0.0
      %vm988 = vcmp.gt.f32.partialorder %v819, 0.0
      %vm989 = vcmp.gt.f32.partialorder %v894, 0.0
      %vm990 = vcmp.gt.f32.partialorder %v896, 0.0
      %vm991 = vcmp.gt.f32.partialorder %v971, 0.0
      %vm992 = vcmp.gt.f32.partialorder %v973, 0.0
      %vm993 = vcmp.gt.f32.partialorder %v592, 0.0
      %vm994 = vcmp.gt.f32.partialorder %v594, 0.0
      %vm995 = vcmp.gt.f32.partialorder %v669, 0.0
      %vm996 = vcmp.gt.f32.partialorder %v671, 0.0
      %vm997 = vcmp.gt.f32.partialorder %v746, 0.0
      %vm998 = vcmp.gt.f32.partialorder %v748, 0.0
      %vm999 = vcmp.gt.f32.partialorder %v823, 0.0
      %vm1000 = vcmp.gt.f32.partialorder %v825, 0.0
      %vm1001 = vcmp.gt.f32.partialorder %v900, 0.0
      %vm1002 = vcmp.gt.f32.partialorder %v902, 0.0
      %vm1003 = vcmp.gt.f32.partialorder %v977, 0.0
      %vm1004 = vcmp.gt.f32.partialorder %v979, 0.0
      %v1005 = vmul.f32 %v586, 0.01
      %v1006 = vmul.f32 %v588, 0.01
      %v1007 = vmul.f32 %v663, 0.01
      %v1008 = vmul.f32 %v665, 0.01
      %v1009 = vmul.f32 %v740, 0.01
      %v1010 = vmul.f32 %v742, 0.01
      %v1011 = vmul.f32 %v817, 0.01
      %v1012 = vmul.f32 %v819, 0.01
      %v1013 = vmul.f32 %v894, 0.01
      %v1014 = vmul.f32 %v896, 0.01
      %v1015 = vmul.f32 %v971, 0.01
      %v1016 = vmul.f32 %v973, 0.01
      %v1017 = vmul.f32 %v592, 0.01
      %v1018 = vmul.f32 %v594, 0.01
      %v1019 = vmul.f32 %v669, 0.01
      %v1020 = vmul.f32 %v671, 0.01
      %v1021 = vmul.f32 %v746, 0.01
      %v1022 = vmul.f32 %v748, 0.01
      %v1023 = vmul.f32 %v823, 0.01
      %v1024 = vmul.f32 %v825, 0.01
      %v1025 = vmul.f32 %v900, 0.01
      %v1026 = vmul.f32 %v902, 0.01
      %v1027 = vmul.f32 %v977, 0.01
      %v1028 = vmul.f32 %v979, 0.01
      %v1029 = vsel %vm981, %v586, %v1005
      %v1030 = vsel %vm982, %v588, %v1006
      %v1031 = vsel %vm983, %v663, %v1007
      %v1032 = vsel %vm984, %v665, %v1008
      %v1033 = vsel %vm985, %v740, %v1009
      %v1034 = vsel %vm986, %v742, %v1010
      %v1035 = vsel %vm987, %v817, %v1011
      %v1036 = vsel %vm988, %v819, %v1012
      %v1037 = vsel %vm989, %v894, %v1013
      %v1038 = vsel %vm990, %v896, %v1014
      %v1039 = vsel %vm991, %v971, %v1015
      %v1040 = vsel %vm992, %v973, %v1016
      %v1041 = vsel %vm993, %v592, %v1017
      %v1042 = vsel %vm994, %v594, %v1018
      %v1043 = vsel %vm995, %v669, %v1019
      %v1044 = vsel %vm996, %v671, %v1020
      %v1045 = vsel %vm997, %v746, %v1021
      %v1046 = vsel %vm998, %v748, %v1022
      %v1047 = vsel %vm999, %v823, %v1023
      %v1048 = vsel %vm1000, %v825, %v1024
      %v1049 = vsel %vm1001, %v900, %v1025
      %v1050 = vsel %vm1002, %v902, %v1026
      %v1051 = vsel %vm1003, %v977, %v1027
      %v1052 = vsel %vm1004, %v979, %v1028
      %v1053 = vld [vmem:[%s2] sm:$0xff]
      %v1054 = vld [vmem:[%s2 + $0x8] sm:$0xff]
      %v1055 = vld [vmem:[%s2 + $0x10] sm:$0xff]
      %v1056 = vld [vmem:[%s2 + $0x18] sm:$0xff]
      %v1057 = vld [vmem:[%s2 + $0x20] sm:$0xff]
      %v1058 = vld [vmem:[%s2 + $0x28] sm:$0xff]
      %v1059 = vld [vmem:[%s2 + $0x30] sm:$0xff]
      %v1060 = vld [vmem:[%s2 + $0x38] sm:$0xff]
      %v1061 = vld [vmem:[%s2 + $0x40] sm:$0xff]
      %v1062 = vld [vmem:[%s2 + $0x48] sm:$0xff]
      %v1063 = vld [vmem:[%s2 + $0x50] sm:$0xff]
      %v1064 = vld [vmem:[%s2 + $0x58] sm:$0xff]
      %v1065 = vld [vmem:[%s2 + $0x60] sm:$0xf]
      %v1066 = vld [vmem:[%s2 + $0x68] sm:$0xf]
      %v1067 = vld [vmem:[%s2 + $0x70] sm:$0xf]
      %v1068 = vld [vmem:[%s2 + $0x78] sm:$0xf]
      %v1069 = vld [vmem:[%s2 + $0x80] sm:$0xf]
      %v1070 = vld [vmem:[%s2 + $0x88] sm:$0xf]
      %v1071 = vld [vmem:[%s2 + $0x90] sm:$0xf]
      %v1072 = vld [vmem:[%s2 + $0x98] sm:$0xf]
      %v1073 = vld [vmem:[%s2 + $0xa0] sm:$0xf]
      %v1074 = vld [vmem:[%s2 + $0xa8] sm:$0xf]
      %v1075 = vld [vmem:[%s2 + $0xb0] sm:$0xf]
      %v1076 = vld [vmem:[%s2 + $0xb8] sm:$0xf]
      %v1077 = vmul.f32 %v1029, %v1053
      %v1078 = vmul.f32 %v1030, %v1054
      %v1079 = vmul.f32 %v1031, %v1055
      %v1080 = vmul.f32 %v1032, %v1056
      %v1081 = vmul.f32 %v1033, %v1057
      %v1082 = vmul.f32 %v1034, %v1058
      %v1083 = vmul.f32 %v1035, %v1059
      %v1084 = vmul.f32 %v1036, %v1060
      %v1085 = vmul.f32 %v1037, %v1061
      %v1086 = vmul.f32 %v1038, %v1062
      %v1087 = vmul.f32 %v1039, %v1063
      %v1088 = vmul.f32 %v1040, %v1064
      %v1089 = vmul.f32 %v1041, %v1065
      %v1090 = vmul.f32 %v1042, %v1066
      %v1091 = vmul.f32 %v1043, %v1067
      %v1092 = vmul.f32 %v1044, %v1068
      %v1093 = vmul.f32 %v1045, %v1069
      %v1094 = vmul.f32 %v1046, %v1070
      %v1095 = vmul.f32 %v1047, %v1071
      %v1096 = vmul.f32 %v1048, %v1072
      %v1097 = vmul.f32 %v1049, %v1073
      %v1098 = vmul.f32 %v1050, %v1074
      %v1099 = vmul.f32 %v1051, %v1075
      %v1100 = vmul.f32 %v1052, %v1076
      %v1101 = vadd.f32 %v1077, %v1078
      %v1102 = vadd.f32 %v1101, %v1079
      %v1103 = vadd.f32 %v1102, %v1080
      %v1104 = vadd.f32 %v1103, %v1081
      %v1105 = vadd.f32 %v1104, %v1082
      %v1106 = vadd.f32 %v1105, %v1083
      %v1107 = vadd.f32 %v1106, %v1084
      %v1108 = vadd.f32 %v1107, %v1085
      %v1109 = vadd.f32 %v1108, %v1086
      %v1110 = vadd.f32 %v1109, %v1087
      %vm1111 = vcmask 924672
      %v1112 = vsel %vm1111, %v1088, 0.0
      %v1113 = vadd.f32 %v1110, %v1112
      %1114 = vadd.xlane.f32.xlu0 %v1113
      %v1115 = vpop.xlane.xlu0 %1114
      %vm1116 = vcmask 1043456
      %v1117 = vsel %vm1116, %v1089, 0.0
      %v1118 = vsel %vm1116, %v1090, 0.0
      %v1119 = vadd.f32 %v1117, %v1118
      %v1120 = vsel %vm1116, %v1091, 0.0
      %v1121 = vadd.f32 %v1119, %v1120
      %v1122 = vsel %vm1116, %v1092, 0.0
      %v1123 = vadd.f32 %v1121, %v1122
      %v1124 = vsel %vm1116, %v1093, 0.0
      %v1125 = vadd.f32 %v1123, %v1124
      %v1126 = vsel %vm1116, %v1094, 0.0
      %v1127 = vadd.f32 %v1125, %v1126
      %v1128 = vsel %vm1116, %v1095, 0.0
      %v1129 = vadd.f32 %v1127, %v1128
      %v1130 = vsel %vm1116, %v1096, 0.0
      %v1131 = vadd.f32 %v1129, %v1130
      %v1132 = vsel %vm1116, %v1097, 0.0
      %v1133 = vadd.f32 %v1131, %v1132
      %v1134 = vsel %vm1116, %v1098, 0.0
      %v1135 = vadd.f32 %v1133, %v1134
      %v1136 = vsel %vm1116, %v1099, 0.0
      %v1137 = vadd.f32 %v1135, %v1136
      %vm1138 = vcmask 920576
      %v1139 = vsel %vm1138, %v1100, 0.0
      %v1140 = vadd.f32 %v1137, %v1139
      %1141 = vadd.xlane.f32.xlu0 %v1140
      %v1142 = vpop.xlane.xlu0 %1141
      %vm1143 = vcmask 7168
      %1144 = vst.msk [vmem:[%s170] sm:$0xff] %vm1143, %v1115
      %vm1145 = vcmask 3072
      %1146 = vst.msk [vmem:[%s170 + $0x8] sm:$0xf] %vm1145, %v1142
      %p1147 = scmp.lt.s32.totalorder %s14, 1
      %s1148 = scalar_select %p1147, %s14, 1
      %s1149 = smul.addr %s1148, 2
      %s1150 = smul.addr %s1149, 8
      %s1151 = scalar_lea.vmem %s3, %s1150
      // Predicated region
      $region33: #{soft_decision_tree_forward.1} parent=31 // pred_check
        %p1152 = pneg %p100
      $region34: #{soft_decision_tree_forward.1} parent=31 // pred_check_branch
        %1154 = sbr.rel (%p1152) target = $region36
      $region35: #{soft_decision_tree_forward.1} parent=31 // pred_region
        _
      $region36: #{soft_decision_tree_forward.1} parent=31 // pred_fallthru
        _
    $region32: #{soft_decision_tree_forward.1} parent=5 // pred_fallthru
      _
    %p1155 = scmp.le.s32.totalorder 2, %s9
    // Predicated region
    $region37: #{soft_decision_tree_forward.1} parent=5 // pred_check
      %p1156 = pneg %p1155
    $region38: #{soft_decision_tree_forward.1} parent=5 // pred_check_branch
      %1158 = sbr.rel (%p1156) target = $region40
    $region39: #{soft_decision_tree_forward.1} parent=5 // pred_region
      %s1159 = ssub.s32 %s9, 2
      // Predicated region
      $region41: #{soft_decision_tree_forward.1} parent=39 // pred_check
        %p1160 = pneg %p106
      $region42: #{soft_decision_tree_forward.1} parent=39 // pred_check_branch
        %1162 = sbr.rel (%p1160) target = $region44
      $region43: #{soft_decision_tree_forward.1} parent=39 // pred_region
        %p1163 = scmp.lt.s32.totalorder %s15, 1
        %s1164 = scalar_select %p1163, %s15, 1
        %s1165 = smul.addr %s1164, 2
        %s1166 = smul.addr %s1165, 8
        %s1167 = scalar_lea.vmem %s3, %s1166
      $region44: #{soft_decision_tree_forward.1} parent=39 // pred_fallthru
        _
    $region40: #{soft_decision_tree_forward.1} parent=5 // pred_fallthru
      _
  $region6: #{soft_decision_tree_forward.1} parent=0 // loop_footer
    %s13 = sadd.s32 1, %s9
  $region7: #{soft_decision_tree_forward.1} parent=0 // loop_footer_branch
    %8 = sbr.rel target = $region3
  $region8: #{soft_decision_tree_forward.1} parent=0 // loop_exit
    _

</llo_original>
